<compile_context>
chip_gen: v7x
topology: tpu7x:2x2x1
jax: 0.10.0
libtpu: 0.0.40
codegen_flags: <defaults>
</compile_context>

<pallas_src>
import functools

import jax
import jax.numpy as jnp
from jax.experimental import pallas as pl
from jax.experimental.pallas import tpu as pltpu

_LANES = 128                 # lane dim (last axis of the slab)
_SUBLANES = 8                # sublane dim of one f32 vreg
_MAX_BLOCK_ROWS = 2048       # (2048, 128) f32 = 1 MiB per input per buffer


def _fdl_kernel(total_rows, yp_ref, yt_ref, td_ref, out_ref, acc_ref):
    """Accumulate sum(|(y_pred - y_true) - target_diff|) into vreg-shaped partials."""
    s = pl.program_id(0)              # "parallel" split (megacore on v7x)
    i = pl.program_id(1)              # "arbitrary" reduction step within the split
    steps = pl.num_programs(1)
    block_rows = yp_ref.shape[0]

    @pl.when(i == 0)
    def _init():
        acc_ref[...] = jnp.zeros_like(acc_ref)

    # Global row index of every element in this block (unclamped; over-coverage
    # steps and the ragged last block are zeroed by the mask below).
    row0 = (s * steps + i) * block_rows
    row_ids = row0 + jax.lax.broadcasted_iota(jnp.int32, (block_rows, _LANES), 0)

    err = jnp.abs((yp_ref[...] - yt_ref[...]) - td_ref[...])
    err = jnp.where(row_ids < total_rows, err, 0.0)

    # Pure VPU adds: fold the block into one (8, 128) vreg-shaped accumulator.
    acc_ref[...] += err.reshape(-1, _SUBLANES, _LANES).sum(axis=0)

    @pl.when(i == steps - 1)
    def _finalize():
        out_ref[0] = acc_ref[...]


def _to_slab(x):
    """Flatten to a lane-dense (rows, 128) f32 slab.

    Pads with at most 1023 zeros, and only if the element count is not already
    a multiple of 8*128 (zeros contribute |0-0-0| = 0 to the sum).
    """
    x = jnp.asarray(x, jnp.float32).reshape(-1)
    pad = (-x.shape[0]) % (_LANES * _SUBLANES)
    if pad:
        x = jnp.pad(x, (0, pad))
    return x.reshape(-1, _LANES)


def feature_difference_loss(y_pred, y_true, target_diff, weight=1.0):
    assert y_pred.shape == y_true.shape == target_diff.shape
    n_elems = int(y_pred.size)

    yp = _to_slab(y_pred)
    yt = _to_slab(y_true)
    td = _to_slab(target_diff)

    rows = yp.shape[0]                          # always a multiple of 8
    block_rows = min(_MAX_BLOCK_ROWS, rows)     # multiple of 8, <= rows
    total_blocks = pl.cdiv(rows, block_rows)
    num_splits = 2 if total_blocks >= 2 else 1  # feeds both TensorCores on v7x
    steps = pl.cdiv(total_blocks, num_splits)

    def in_map(s, i):
        # Clamp over-coverage steps onto the last valid block; the in-kernel
        # row mask zeroes their contribution, so re-reading it is harmless.
        return (jnp.minimum(s * steps + i, total_blocks - 1), 0)

    in_spec = pl.BlockSpec((block_rows, _LANES), in_map)

    partials = pl.pallas_call(
        functools.partial(_fdl_kernel, rows),
        out_shape=jax.ShapeDtypeStruct((num_splits, _SUBLANES, _LANES), jnp.float32),
        grid_spec=pltpu.PrefetchScalarGridSpec(
            num_scalar_prefetch=0,
            grid=(num_splits, steps),
            in_specs=[in_spec, in_spec, in_spec],
            out_specs=pl.BlockSpec((1, _SUBLANES, _LANES), lambda s, i: (s, 0, 0)),
            scratch_shapes=[pltpu.VMEM((_SUBLANES, _LANES), jnp.float32)],
        ),
        compiler_params=pltpu.CompilerParams(
            dimension_semantics=("parallel", "arbitrary"),
        ),
    )(yp, yt, td)

    # Single final cross-lane reduce + weight / mean normalization, hoisted out
    # of the per-element path (trivially cheap in XLA).
    return jnp.sum(partials) * weight / n_elems


if __name__ == "__main__":
    key = jax.random.PRNGKey(0)
    k1, k2, k3 = jax.random.split(key, 3)

    shape = (2, 4, 16, 16)  # small NCHW-style feature maps
    y_pred = jax.random.normal(k1, shape, dtype=jnp.float32)
    y_true = jax.random.normal(k2, shape, dtype=jnp.float32)
    target_diff = jax.random.normal(k3, shape, dtype=jnp.float32)
    weight = 0.5

    loss = feature_difference_loss(y_pred, y_true, target_diff, weight)
    loss = jax.block_until_ready(loss)

    # Pure-JAX reference check.
    ref = jnp.mean(jnp.abs((y_pred - y_true) - target_diff) * weight)
    assert jnp.allclose(loss, ref, rtol=1e-5, atol=1e-6), (loss, ref)

    print("KERNEL_OK")
</pallas_src>

<mosaic_0001>
module attributes {stable_mosaic.version = 11 : i64} {
  func.func @_fdl_kernel(%arg0: i32, %arg1: i32, %arg2: memref<16x128xf32, #tpu.memory_space<vmem>>, %arg3: memref<16x128xf32, #tpu.memory_space<vmem>>, %arg4: memref<16x128xf32, #tpu.memory_space<vmem>>, %arg5: memref<1x8x128xf32, #tpu.memory_space<vmem>>, %arg6: memref<8x128xf32, #tpu.memory_space<vmem>>) attributes {dimension_semantics = [#tpu.dimension_semantics<parallel>, #tpu.dimension_semantics<arbitrary>], iteration_bounds = array<i64: 1, 1>, scalar_prefetch = 0 : i64, scratch_operands = 1 : i64, tpu.core_type = #tpu.core_type<tc>, window_params = [{transform_indices = @transform_0, window_bounds = array<i64: 16, 128>}, {transform_indices = @transform_1, window_bounds = array<i64: 16, 128>}, {transform_indices = @transform_2, window_bounds = array<i64: 16, 128>}, {transform_indices = @transform_3, window_bounds = array<i64: 1, 8, 128>}]} {
    %c0_i32 = arith.constant 0 : i32
    %0 = arith.cmpi eq, %arg1, %c0_i32 : i32
    %1 = arith.extui %0 : i1 to i32
    %c0_i32_0 = arith.constant 0 : i32
    %2 = arith.cmpi ne, %1, %c0_i32_0 : i32
    scf.if %2 {
      %cst_14 = arith.constant 0.000000e+00 : f32
      %27 = vector.broadcast %cst_14 : f32 to vector<8x128xf32>
      %c0_15 = arith.constant 0 : index
      %c0_16 = arith.constant 0 : index
      %28 = vector.load %arg6[%c0_15, %c0_16] : memref<8x128xf32, #tpu.memory_space<vmem>>, vector<8x128xf32>
      tpu.vector_store %arg6[%c0_15, %c0_16], %27 {strides = array<i32>} : memref<8x128xf32, #tpu.memory_space<vmem>>, vector<8x128xf32>,
    } else {
    }
    %c1_i32 = arith.constant 1 : i32
    %3 = arith.muli %arg0, %c1_i32 : i32
    %4 = arith.addi %3, %arg1 : i32
    %c16_i32 = arith.constant 16 : i32
    %5 = arith.muli %4, %c16_i32 : i32
    %6 = tpu.iota {dimensions = array<i32: 0>} : vector<16x128xi32>
    %7 = vector.broadcast %5 : i32 to vector<16x128xi32>
    %8 = arith.addi %7, %6 : vector<16x128xi32>
    %c0 = arith.constant 0 : index
    %c0_1 = arith.constant 0 : index
    %9 = vector.load %arg2[%c0, %c0_1] : memref<16x128xf32, #tpu.memory_space<vmem>>, vector<16x128xf32>
    %c0_2 = arith.constant 0 : index
    %c0_3 = arith.constant 0 : index
    %10 = vector.load %arg3[%c0_2, %c0_3] : memref<16x128xf32, #tpu.memory_space<vmem>>, vector<16x128xf32>
    %11 = arith.subf %9, %10 : vector<16x128xf32>
    %c0_4 = arith.constant 0 : index
    %c0_5 = arith.constant 0 : index
    %12 = vector.load %arg4[%c0_4, %c0_5] : memref<16x128xf32, #tpu.memory_space<vmem>>, vector<16x128xf32>
    %13 = arith.subf %11, %12 : vector<16x128xf32>
    %14 = math.absf %13 : vector<16x128xf32>
    %c16_i32_6 = arith.constant 16 : i32
    %15 = vector.broadcast %c16_i32_6 : i32 to vector<16x128xi32>
    %16 = arith.cmpi slt, %8, %15 : vector<16x128xi32>
    %cst = arith.constant 0.000000e+00 : f32
    %17 = vector.broadcast %cst : f32 to vector<16x128xf32>
    %18 = arith.select %16, %14, %17 : vector<16x128xi1>, vector<16x128xf32>
    %c0_7 = arith.constant 0 : index
    %c0_8 = arith.constant 0 : index
    %19 = vector.load %arg6[%c0_7, %c0_8] : memref<8x128xf32, #tpu.memory_space<vmem>>, vector<8x128xf32>
    %20 = vector.shape_cast %18 : vector<16x128xf32> to vector<2x8x128xf32>
    %cst_9 = arith.constant dense<0.000000e+00> : vector<8x128xf32>
    %21 = vector.multi_reduction <add>, %20, %cst_9 [0] : vector<2x8x128xf32> to vector<8x128xf32>
    %22 = arith.addf %19, %21 : vector<8x128xf32>
    %c0_10 = arith.constant 0 : index
    %c0_11 = arith.constant 0 : index
    %23 = vector.load %arg6[%c0_10, %c0_11] : memref<8x128xf32, #tpu.memory_space<vmem>>, vector<8x128xf32>
    tpu.vector_store %arg6[%c0_10, %c0_11], %22 {strides = array<i32>} : memref<8x128xf32, #tpu.memory_space<vmem>>, vector<8x128xf32>,
    %c0_i32_12 = arith.constant 0 : i32
    %24 = arith.cmpi eq, %arg1, %c0_i32_12 : i32
    %25 = arith.extui %24 : i1 to i32
    %c0_i32_13 = arith.constant 0 : i32
    %26 = arith.cmpi ne, %25, %c0_i32_13 : i32
    scf.if %26 {
      %c0_14 = arith.constant 0 : index
      %c0_15 = arith.constant 0 : index
      %27 = vector.load %arg6[%c0_14, %c0_15] : memref<8x128xf32, #tpu.memory_space<vmem>>, vector<8x128xf32>
      %c0_16 = arith.constant 0 : index
      %c0_17 = arith.constant 0 : index
      %c0_18 = arith.constant 0 : index
      %28 = vector.load %arg5[%c0_16, %c0_17, %c0_18] : memref<1x8x128xf32, #tpu.memory_space<vmem>>, vector<1x8x128xf32>
      %29 = vector.shape_cast %28 : vector<1x8x128xf32> to vector<8x128xf32>
      %30 = vector.shape_cast %27 : vector<8x128xf32> to vector<1x8x128xf32>
      tpu.vector_store %arg5[%c0_16, %c0_17, %c0_18], %30 {strides = array<i32>} : memref<1x8x128xf32, #tpu.memory_space<vmem>>, vector<1x8x128xf32>,
    } else {
    }
    return
  }
  func.func @transform_0(%arg0: i32, %arg1: i32) -> (i32, i32) {
    %c1_i32 = arith.constant 1 : i32
    %0 = arith.muli %arg0, %c1_i32 : i32
    %1 = arith.addi %0, %arg1 : i32
    %c0_i32 = arith.constant 0 : i32
    %2 = arith.minsi %1, %c0_i32 : i32
    %c0_i32_0 = arith.constant 0 : i32
    %c0_i32_1 = arith.constant 0 : i32
    return %2, %c0_i32_0 : i32, i32
  }
  func.func @transform_1(%arg0: i32, %arg1: i32) -> (i32, i32) {
    %c1_i32 = arith.constant 1 : i32
    %0 = arith.muli %arg0, %c1_i32 : i32
    %1 = arith.addi %0, %arg1 : i32
    %c0_i32 = arith.constant 0 : i32
    %2 = arith.minsi %1, %c0_i32 : i32
    %c0_i32_0 = arith.constant 0 : i32
    %c0_i32_1 = arith.constant 0 : i32
    return %2, %c0_i32_0 : i32, i32
  }
  func.func @transform_2(%arg0: i32, %arg1: i32) -> (i32, i32) {
    %c1_i32 = arith.constant 1 : i32
    %0 = arith.muli %arg0, %c1_i32 : i32
    %1 = arith.addi %0, %arg1 : i32
    %c0_i32 = arith.constant 0 : i32
    %2 = arith.minsi %1, %c0_i32 : i32
    %c0_i32_0 = arith.constant 0 : i32
    %c0_i32_1 = arith.constant 0 : i32
    return %2, %c0_i32_0 : i32, i32
  }
  func.func @transform_3(%arg0: i32, %arg1: i32) -> (i32, i32, i32) {
    %c0_i32 = arith.constant 0 : i32
    %c0_i32_0 = arith.constant 0 : i32
    %c0_i32_1 = arith.constant 0 : i32
    return %arg0, %c0_i32, %c0_i32_0 : i32, i32, i32
  }
}

</mosaic_0001>

<llo_original>
// kernel: tpu_custom_call.1
$region0: #{tpu_custom_call.1}
  #allocation0 [shape = 'u32[]', space=smem, size = 0x4, offset = 0x4, fixed_abs, tag = 'smem constant byte address 0x4 - core index']
  #allocation1 [shape = 'u32[144,128]{1,0:T(1,128)}', space=vmem, size = 0x12000, scoped, tag = 'internal scratch']
  #allocation2 [shape = 'f32[8,128]{1,0:T(8,128)}', space=vmem, size = 0x1000, scoped, tag = 'scratch operand']
  %s0 = inlined_call_operand.hbm [shape: f32[16,128], index: 0, kind: input, shape index: {}]
  %s1 = inlined_call_operand.hbm [shape: f32[16,128], index: 1, kind: input, shape index: {}]
  %s2 = inlined_call_operand.hbm [shape: f32[16,128], index: 2, kind: input, shape index: {}]
  %s3 = inlined_call_operand.hbm [shape: f32[1,8,128], index: 3, kind: output, shape index: {}]
  %s4 = sld [smem:[#allocation0]]
  $region42: #{tpu_custom_call.1} parent=0
    _
  %s6 = ssub.s32 1, %s4
  %s7 = scalar_select 0, %s6, %s4
  $region1: #{tpu_custom_call.1} parent=0
    #allocation3 [shape = 'u8[8192]{0}', space=vmem, size = 0x2000, scoped, tag = 'input window, operand 0, single buffered']
    #allocation4 [shape = 's32[1]{0}', space=sflag, size = 0x4, scoped, tag = 'scoped memory for tpu_custom_call.1']
    #allocation5 [shape = 's32[1]{0}', space=sflag, size = 0x4, scoped, tag = 'scoped memory for tpu_custom_call.1']
    #allocation6 [shape = 'u8[8192]{0}', space=vmem, size = 0x2000, scoped, tag = 'input window, operand 1, single buffered']
    #allocation7 [shape = 's32[1]{0}', space=sflag, size = 0x4, scoped, tag = 'scoped memory for tpu_custom_call.1']
    #allocation8 [shape = 'u8[8192]{0}', space=vmem, size = 0x2000, scoped, tag = 'input window, operand 2, single buffered']
    #allocation9 [shape = 'u8[4096]{0}', space=vmem, size = 0x1000, scoped, tag = 'output window, operand 0, single buffered']
    %8 = vsyncpa [#allocation4], 0
    %9 = vsyncpa [#allocation7], 0
    %10 = vsyncpa [#allocation5], 0
    // Predicated region
    $region2: #{tpu_custom_call.1} parent=1 // pred_check
      _
    $region3: #{tpu_custom_call.1} parent=1 // pred_check_branch
      %12 = sbr.rel (0) target = $region5
    $region4: #{tpu_custom_call.1} parent=1 // pred_region
      %s13 = sadd.s32 0, 0
      %p14 = scmp.lt.s32.totalorder %s13, 0
      %s15 = scalar_select %p14, %s13, 0
      %s16 = smul.u32 2, %s15
      %s18 = ssub.s32 256, 256
      %19 = vsyncadd [#allocation4], %s18
      %s20 = smul.addr %s16, 128
      %s21 = scalar_lea.hbm %s0, %s20
      %s22 = sshll.u32 [#allocation3], 4
      %s23 = int_to_ptr.vmem [resolvable:$true] %s22
      %28 = dma.hbm_to_vmem [thread:$0]  %s21, 256, %s23, [#allocation4], 128, 128, 8
    $region5: #{tpu_custom_call.1} parent=1 // pred_fallthru
      _
    // Predicated region
    $region6: #{tpu_custom_call.1} parent=1 // pred_check
      _
    $region7: #{tpu_custom_call.1} parent=1 // pred_check_branch
      %30 = sbr.rel (0) target = $region9
    $region8: #{tpu_custom_call.1} parent=1 // pred_region
      %s31 = sadd.s32 0, 0
      %p32 = scmp.lt.s32.totalorder %s31, 0
      %s33 = scalar_select %p32, %s31, 0
      %s34 = smul.u32 2, %s33
      %s36 = ssub.s32 256, 256
      %37 = vsyncadd [#allocation7], %s36
      %s38 = smul.addr %s34, 128
      %s39 = scalar_lea.hbm %s1, %s38
      %s40 = sshll.u32 [#allocation6], 4
      %s41 = int_to_ptr.vmem [resolvable:$true] %s40
      %46 = dma.hbm_to_vmem [thread:$0]  %s39, 256, %s41, [#allocation7], 128, 128, 8
    $region9: #{tpu_custom_call.1} parent=1 // pred_fallthru
      _
    // Predicated region
    $region10: #{tpu_custom_call.1} parent=1 // pred_check
      _
    $region11: #{tpu_custom_call.1} parent=1 // pred_check_branch
      %48 = sbr.rel (0) target = $region13
    $region12: #{tpu_custom_call.1} parent=1 // pred_region
      %s49 = sadd.s32 0, 0
      %p50 = scmp.lt.s32.totalorder %s49, 0
      %s51 = scalar_select %p50, %s49, 0
      %s52 = smul.u32 2, %s51
      %s54 = ssub.s32 256, 256
      %55 = vsyncadd [#allocation7], %s54
      %s56 = smul.addr %s52, 128
      %s57 = scalar_lea.hbm %s2, %s56
      %s58 = sshll.u32 [#allocation8], 4
      %s59 = int_to_ptr.vmem [resolvable:$true] %s58
      %64 = dma.hbm_to_vmem [thread:$0]  %s57, 256, %s59, [#allocation7], 128, 128, 8
    $region13: #{tpu_custom_call.1} parent=1 // pred_fallthru
      _
    // Predicated region
    $region14: #{tpu_custom_call.1} parent=1 // pred_check
      _
    $region15: #{tpu_custom_call.1} parent=1 // pred_check_branch
      %66 = sbr.rel (0) target = $region17
    $region16: #{tpu_custom_call.1} parent=1 // pred_region
      %67 = dma.done [#allocation4], 256
    $region17: #{tpu_custom_call.1} parent=1 // pred_fallthru
      _
    // Predicated region
    $region18: #{tpu_custom_call.1} parent=1 // pred_check
      _
    $region19: #{tpu_custom_call.1} parent=1 // pred_check_branch
      %69 = sbr.rel (0) target = $region21
    $region20: #{tpu_custom_call.1} parent=1 // pred_region
      %70 = dma.done [#allocation7], 256
    $region21: #{tpu_custom_call.1} parent=1 // pred_fallthru
      _
    // Predicated region
    $region22: #{tpu_custom_call.1} parent=1 // pred_check
      _
    $region23: #{tpu_custom_call.1} parent=1 // pred_check_branch
      %72 = sbr.rel (0) target = $region25
    $region24: #{tpu_custom_call.1} parent=1 // pred_region
      %73 = dma.done [#allocation7], 256
    $region25: #{tpu_custom_call.1} parent=1 // pred_fallthru
      _
    %s74 = sadd.s32 0, 0
    %p75 = scmp.lt.s32.totalorder %s74, 0
    %s76 = scalar_select %p75, %s74, 0
    %s77 = smul.u32 2, %s76
    %s78 = sadd.s32 0, 0
    %p79 = scmp.lt.s32.totalorder %s78, 0
    %s80 = scalar_select %p79, %s78, 0
    %s81 = smul.u32 2, %s80
    %s82 = sadd.s32 0, 0
    %p83 = scmp.lt.s32.totalorder %s82, 0
    %s84 = scalar_select %p83, %s82, 0
    %s85 = smul.u32 2, %s84
    %p86 = scmp.eq.s32.totalorder 0, 0
    // Predicated region
    $region26: #{tpu_custom_call.1} parent=1 // pred_check
      %p87 = pneg %p86
    $region27: #{tpu_custom_call.1} parent=1 // pred_check_branch
      %89 = sbr.rel (%p87) target = $region29
    $region28: #{tpu_custom_call.1} parent=1 // pred_region
      %90 = vst [vmem:[#allocation2] sm:$0xff] 0.0
    $region29: #{tpu_custom_call.1} parent=1 // pred_fallthru
      _
    %s91 = sadd.s32 0, 0
    %s92 = smul.u32 %s91, 16
    %v93 = vlaneseq
    %v94 = vshrl.u32 %v93, 7
    %v95 = vadd.s32 %v94, 8
    %v96 = vstv %s92
    %v97 = vadd.s32 %v96, %v94
    %v98 = vadd.s32 %v96, %v95
    %v99 = vld [vmem:[#allocation3] sm:$0xff]
    %v100 = vld [vmem:[#allocation3 + $0x8] sm:$0xff]
    %v101 = vld [vmem:[#allocation6] sm:$0xff]
    %v102 = vld [vmem:[#allocation6 + $0x8] sm:$0xff]
    %v103 = vsub.f32 %v99, %v101
    %v104 = vsub.f32 %v100, %v102
    %v105 = vld [vmem:[#allocation8] sm:$0xff]
    %v106 = vld [vmem:[#allocation8 + $0x8] sm:$0xff]
    %v107 = vsub.f32 %v103, %v105
    %v108 = vsub.f32 %v104, %v106
    %v109 = vand.u32 2147483647, %v107
    %v110 = vand.u32 2147483647, %v108
    %vm111 = vcmp.lt.s32.totalorder %v97, 16
    %vm112 = vcmp.lt.s32.totalorder %v98, 16
    %v113 = vsel %vm111, %v109, 0.0
    %v114 = vsel %vm112, %v110, 0.0
    %v115 = vld [vmem:[#allocation2] sm:$0xff]
    %v116 = vadd.f32 %v113, %v114
    %v117 = vadd.f32 %v115, %v116
    %118 = vst [vmem:[#allocation2] sm:$0xff] %v117
    // Predicated region
    $region30: #{tpu_custom_call.1} parent=1 // pred_check
      %p119 = pneg %p86
    $region31: #{tpu_custom_call.1} parent=1 // pred_check_branch
      %121 = sbr.rel (%p119) target = $region33
    $region32: #{tpu_custom_call.1} parent=1 // pred_region
      %v122 = vld [vmem:[#allocation2] sm:$0xff]
      %123 = vst [vmem:[#allocation9] sm:$0xff] %v122
    $region33: #{tpu_custom_call.1} parent=1 // pred_fallthru
      _
    // Predicated region
    $region34: #{tpu_custom_call.1} parent=1 // pred_check
      _
    $region35: #{tpu_custom_call.1} parent=1 // pred_check_branch
      %125 = sbr.rel (0) target = $region37
    $region36: #{tpu_custom_call.1} parent=1 // pred_region
      %s127 = ssub.s32 128, 128
      %128 = vsyncadd [#allocation5], %s127
      %s130 = sshll.u32 [#allocation9], 4
      %s131 = int_to_ptr.vmem [resolvable:$true] %s130
      %133 = dma.vmem_to_hbm [thread:$0]  %s131, 128, %s3, [#allocation5]
    $region37: #{tpu_custom_call.1} parent=1 // pred_fallthru
      _
    // Predicated region
    $region38: #{tpu_custom_call.1} parent=1 // pred_check
      _
    $region39: #{tpu_custom_call.1} parent=1 // pred_check_branch
      %135 = sbr.rel (0) target = $region41
    $region40: #{tpu_custom_call.1} parent=1 // pred_region
      %136 = dma.done [#allocation5], 128
    $region41: #{tpu_custom_call.1} parent=1 // pred_fallthru
      _
    %137 = vsyncpa [#allocation4], 1
    %138 = vsyncpa [#allocation7], 1
    %139 = vsyncpa [#allocation5], 1

</llo_original>
